<compile_context>
chip_gen: v6e
topology: v6e:2x2x1
jax: 0.10.0
libtpu: 0.0.40
codegen_flags: <defaults>
</compile_context>

<pallas_src>
import functools

import jax
import jax.numpy as jnp
from jax.experimental import pallas as pl
from jax.experimental.pallas import tpu as pltpu

NUM_BOND_TYPE = 6
NUM_BOND_DIRECTION = 3
NUM_ATOM_TYPE = 120
NUM_CHIRALITY_TAG = 3
BN_EPS = 1e-5
LANE = 128
SUBLANE = 8


def _round_up(v, m):
    return (v + m - 1) // m * m


def _vmem_limit_bytes():
    # v7x TensorCores have 64 MiB physical VMEM (leave headroom for compiler
    # temporaries such as the [Np, Hp] f32 hidden activation); v5e/v6e have
    # 128 MiB, so raise the scoped default instead.
    try:
        kind = jax.devices()[0].device_kind.lower()
    except Exception:
        kind = ""
    if "v7" in kind or "7x" in kind:
        return 48 * 1024 * 1024
    return 100 * 1024 * 1024


# ---------------------------------------------------------------------------
# Fused Pallas kernel, one grid step per GIN layer:
#   message passing -> MLP -> BatchNorm [-> ReLU], mean-pool epilogue on the
#   last step.  Node features live in a VMEM scratch accumulator.
# ---------------------------------------------------------------------------
def fused_gin_kernel(inv_n,
                     adj_ref, h0_ref, mask_ref, pool_ref, econ_ref,
                     w1_ref, b1_ref, w2_ref, b2_ref, gamma_ref, beta_ref,
                     node_out_ref, pool_out_ref,
                     h_scr):
    l = pl.program_id(0)
    last = pl.num_programs(0) - 1

    @pl.when(l == 0)
    def _():
        h_scr[...] = h0_ref[...]

    # message passing: aggr_i = sum_{e: dst=i} (h_src[e] + edge_emb_e)
    # structural part = one dense bf16 adjacency matmul (exact for edge
    # multiplicities <= 256); edge-embedding part precomputed per layer (bf16).
    aggr = (jnp.dot(adj_ref[...], h_scr[...].astype(jnp.bfloat16),
                    preferred_element_type=jnp.float32)
            + econ_ref[0].astype(jnp.float32))

    # GIN update MLP: Linear(D, 2D) -> ReLU -> Linear(2D, D) on the bf16 MXU
    # path (f32 accumulation, f32 biases).
    h1 = jnp.dot(aggr.astype(jnp.bfloat16), w1_ref[0],
                 preferred_element_type=jnp.float32) + b1_ref[0]
    h1 = jnp.maximum(h1, 0.0)
    h2 = jnp.dot(h1.astype(jnp.bfloat16), w2_ref[0],
                 preferred_element_type=jnp.float32) + b2_ref[0]

    # BatchNorm1d (training-mode batch statistics, biased variance) in a
    # single masked pass; padded node rows contribute zero.
    h2m = h2 * mask_ref[...]
    mean = jnp.sum(h2m, axis=0, keepdims=True) * inv_n
    ex2 = jnp.sum(h2m * h2m, axis=0, keepdims=True) * inv_n
    var = jnp.maximum(ex2 - mean * mean, 0.0)
    h = (h2 - mean) * jax.lax.rsqrt(var + BN_EPS) * gamma_ref[0] + beta_ref[0]

    # dropout(p=0) is identity; ReLU on every layer except the last.
    @pl.when(l != last)
    def _():
        h_scr[...] = jnp.maximum(h, 0.0)

    @pl.when(l == last)
    def _():
        node_out_ref[...] = h                                   # JK = 'last'
        # global_mean_pool fused as epilogue: pool rows = one_hot(batch)/count
        pool_out_ref[...] = jnp.dot(pool_ref[...], h.astype(jnp.bfloat16),
                                    preferred_element_type=jnp.float32)


# ---------------------------------------------------------------------------
# Parameter init (deterministic; mirrors the PyTorch module's __init__ shapes)
# ---------------------------------------------------------------------------
def init_params(key, num_layer, emb_dim, num_tasks):
    def xavier(k, shape):
        bound = (6.0 / (shape[0] + shape[1])) ** 0.5
        return jax.random.uniform(k, shape, jnp.float32, -bound, bound)

    def linear(k, fan_in, fan_out):
        kw, kb = jax.random.split(k)
        bound = 1.0 / fan_in ** 0.5
        w = jax.random.uniform(kw, (fan_in, fan_out), jnp.float32, -bound, bound)
        b = jax.random.uniform(kb, (1, fan_out), jnp.float32, -bound, bound)
        return w, b

    keys = jax.random.split(key, 3 + 4 * num_layer)
    params = {
        "emb_dim": emb_dim,
        "num_layer": num_layer,
        "x_emb1": xavier(keys[0], (NUM_ATOM_TYPE, emb_dim)),
        "x_emb2": xavier(keys[1], (NUM_CHIRALITY_TAG, emb_dim)),
        "layers": [],
    }
    idx = 2
    for _ in range(num_layer):
        w1, b1 = linear(keys[idx], emb_dim, 2 * emb_dim)
        w2, b2 = linear(keys[idx + 1], 2 * emb_dim, emb_dim)
        params["layers"].append({
            "w1": w1, "b1": b1, "w2": w2, "b2": b2,
            "e_emb1": xavier(keys[idx + 2], (NUM_BOND_TYPE, emb_dim)),
            "e_emb2": xavier(keys[idx + 3], (NUM_BOND_DIRECTION, emb_dim)),
            "gamma": jnp.ones((1, emb_dim), jnp.float32),
            "beta": jnp.zeros((1, emb_dim), jnp.float32),
        })
        idx += 4
    # graph_pred_linear exists in the module but is NOT applied in forward();
    # kept only for parameter-shape fidelity.
    gw, gb = linear(keys[idx], emb_dim, num_tasks)
    params["graph_pred_w"], params["graph_pred_b"] = gw, gb
    return params


# ---------------------------------------------------------------------------
# GNN_graphpred forward
# ---------------------------------------------------------------------------
def gnn_graphpred_forward(params, x, edge_index, edge_attr, batch, num_graphs):
    N, D = x.shape[0], params["emb_dim"]
    L = params["num_layer"]
    Np = _round_up(max(N, SUBLANE), SUBLANE)
    Dp = _round_up(max(D, LANE), LANE)
    Hp = _round_up(max(2 * D, LANE), LANE)          # hidden padded independently
    Gp = _round_up(max(num_graphs, SUBLANE), SUBLANE)

    # ---- glue: integer embedding lookups / graph-structure prep (XLA) -----
    h0 = (jnp.take(params["x_emb1"], x[:, 0], axis=0)
          + jnp.take(params["x_emb2"], x[:, 1], axis=0))                # [N, D]
    h0 = jnp.zeros((Np, Dp), jnp.float32).at[:N, :D].set(h0)

    # add_self_loops + self-loop edge attr (bond type 4, direction 0)
    self_idx = jnp.arange(N, dtype=edge_index.dtype)
    ei = jnp.concatenate([edge_index, jnp.stack([self_idx, self_idx])], axis=1)
    self_attr = jnp.concatenate(
        [jnp.full((N, 1), 4, dtype=edge_attr.dtype),
         jnp.zeros((N, 1), dtype=edge_attr.dtype)], axis=1)
    ea = jnp.concatenate([edge_attr, self_attr], axis=0)                # [Et, 2]
    src, dst = ei[0], ei[1]

    # dense adjacency with edge multiplicity + self loops
    # (bf16 is exact for per-(dst,src) multiplicity <= 256)
    adj = jnp.zeros((Np, Np), jnp.float32).at[dst, src].add(1.0)
    adj = adj.astype(jnp.bfloat16)

    # per-layer edge-embedding contribution: econ_i = sum_{e: dst=i} edge_emb_e
    econ = []
    for lp in params["layers"]:
        e_emb = (jnp.take(lp["e_emb1"], ea[:, 0], axis=0)
                 + jnp.take(lp["e_emb2"], ea[:, 1], axis=0))            # [Et, D]
        c = jax.ops.segment_sum(e_emb, dst, num_segments=Np)            # [Np, D]
        econ.append(jnp.zeros((Np, Dp), jnp.float32).at[:, :D].set(c))
    econ = jnp.stack(econ).astype(jnp.bfloat16)                         # [L,Np,Dp]

    # lane-dense (zero-padded) per-layer parameters; weights in bf16
    def pad2(w, r, c):
        return jnp.zeros((r, c), jnp.float32).at[:w.shape[0], :w.shape[1]].set(w)

    w1 = jnp.stack([pad2(lp["w1"], Dp, Hp) for lp in params["layers"]]
                   ).astype(jnp.bfloat16)                                # [L,Dp,Hp]
    b1 = jnp.stack([pad2(lp["b1"], 1, Hp) for lp in params["layers"]])   # [L,1,Hp]
    w2 = jnp.stack([pad2(lp["w2"], Hp, Dp) for lp in params["layers"]]
                   ).astype(jnp.bfloat16)                                # [L,Hp,Dp]
    b2 = jnp.stack([pad2(lp["b2"], 1, Dp) for lp in params["layers"]])   # [L,1,Dp]
    gamma = jnp.stack([jnp.ones((1, Dp), jnp.float32).at[:, :D].set(lp["gamma"])
                       for lp in params["layers"]])                     # [L,1,Dp]
    beta = jnp.stack([pad2(lp["beta"], 1, Dp) for lp in params["layers"]])

    mask = jnp.zeros((Np, 1), jnp.float32).at[:N].set(1.0)

    # mean-pool matrix: rows = one_hot(batch) / count, padded to [Gp, Np], bf16
    pone = jax.nn.one_hot(batch, Gp, dtype=jnp.float32).T               # [Gp, N]
    counts = jnp.maximum(jnp.sum(pone, axis=1, keepdims=True), 1.0)
    pool_mat = jnp.zeros((Gp, Np), jnp.float32).at[:, :N].set(pone / counts)
    pool_mat = pool_mat.astype(jnp.bfloat16)

    args = (adj, h0, mask, pool_mat, econ, w1, b1, w2, b2, gamma, beta)
    const2 = lambda l: (0, 0)
    per_layer = lambda l: (l, 0, 0)
    in_specs = [
        pl.BlockSpec((Np, Np), const2),          # adj (resident)
        pl.BlockSpec((Np, Dp), const2),          # h0 (resident, read at l==0)
        pl.BlockSpec((Np, 1), const2),           # mask (resident)
        pl.BlockSpec((Gp, Np), const2),          # pool (resident)
        pl.BlockSpec((1, Np, Dp), per_layer),    # econ  (streamed per layer)
        pl.BlockSpec((1, Dp, Hp), per_layer),    # w1
        pl.BlockSpec((1, 1, Hp), per_layer),     # b1
        pl.BlockSpec((1, Hp, Dp), per_layer),    # w2
        pl.BlockSpec((1, 1, Dp), per_layer),     # b2
        pl.BlockSpec((1, 1, Dp), per_layer),     # gamma
        pl.BlockSpec((1, 1, Dp), per_layer),     # beta
    ]
    out_specs = [pl.BlockSpec((Np, Dp), const2),
                 pl.BlockSpec((Gp, Dp), const2)]

    node_rep_p, pooled_p = pl.pallas_call(
        functools.partial(fused_gin_kernel, 1.0 / float(N)),
        grid=(L,),
        in_specs=in_specs,
        out_specs=out_specs,
        out_shape=(jax.ShapeDtypeStruct((Np, Dp), jnp.float32),
                   jax.ShapeDtypeStruct((Gp, Dp), jnp.float32)),
        scratch_shapes=[pltpu.VMEM((Np, Dp), jnp.float32)],
        compiler_params=pltpu.CompilerParams(
            dimension_semantics=("arbitrary",),
            vmem_limit_bytes=_vmem_limit_bytes()),
    )(*args)

    node_representation = node_rep_p[:N, :D]
    pooled = pooled_p[:num_graphs, :D]
    return pooled, node_representation


# ---------------------------------------------------------------------------
# Pure-JAX reference (index-based message passing) for correctness check.
# Mirrors the kernel's bf16 rounding of h / aggr / h1 / weights.
# ---------------------------------------------------------------------------
def reference_forward(params, x, edge_index, edge_attr, batch, num_graphs):
    N = x.shape[0]
    L = params["num_layer"]
    hp = jax.lax.Precision.HIGHEST
    bf = lambda a: a.astype(jnp.bfloat16).astype(jnp.float32)
    h = (jnp.take(params["x_emb1"], x[:, 0], axis=0)
         + jnp.take(params["x_emb2"], x[:, 1], axis=0))
    self_idx = jnp.arange(N, dtype=edge_index.dtype)
    ei = jnp.concatenate([edge_index, jnp.stack([self_idx, self_idx])], axis=1)
    self_attr = jnp.concatenate(
        [jnp.full((N, 1), 4, dtype=edge_attr.dtype),
         jnp.zeros((N, 1), dtype=edge_attr.dtype)], axis=1)
    ea = jnp.concatenate([edge_attr, self_attr], axis=0)
    src, dst = ei[0], ei[1]
    for layer in range(L):
        lp = params["layers"][layer]
        e_emb = (jnp.take(lp["e_emb1"], ea[:, 0], axis=0)
                 + jnp.take(lp["e_emb2"], ea[:, 1], axis=0))
        msg = jnp.take(bf(h), src, axis=0) + bf(e_emb)
        aggr = jax.ops.segment_sum(msg, dst, num_segments=N)
        h1 = jnp.maximum(jnp.dot(bf(aggr), bf(lp["w1"]), precision=hp)
                         + lp["b1"], 0.0)
        h2 = jnp.dot(bf(h1), bf(lp["w2"]), precision=hp) + lp["b2"]
        mean = jnp.mean(h2, axis=0, keepdims=True)
        var = jnp.mean((h2 - mean) ** 2, axis=0, keepdims=True)
        h = (h2 - mean) * jax.lax.rsqrt(var + BN_EPS) * lp["gamma"] + lp["beta"]
        if layer != L - 1:
            h = jnp.maximum(h, 0.0)
    sums = jax.ops.segment_sum(h, batch, num_segments=num_graphs)
    cnts = jnp.maximum(jax.ops.segment_sum(jnp.ones((N,), jnp.float32), batch,
                                           num_segments=num_graphs), 1.0)
    return sums / cnts[:, None], h


# ---------------------------------------------------------------------------
if __name__ == "__main__":
    num_layer, emb_dim, num_tasks = 2, 32, 3
    N, E, G = 8, 8, 2

    key = jax.random.PRNGKey(0)
    k1, k2, k3, k4, k5 = jax.random.split(key, 5)
    atom_type = jax.random.randint(k1, (N,), 0, NUM_ATOM_TYPE)
    chirality = jax.random.randint(k2, (N,), 0, NUM_CHIRALITY_TAG)
    x = jnp.stack([atom_type, chirality], axis=1).astype(jnp.int32)      # [N, 2]
    edge_index = jax.random.randint(k3, (2, E), 0, N).astype(jnp.int32)  # [2, E]
    bond_type = jax.random.randint(k4, (E,), 0, NUM_BOND_TYPE)
    bond_dir = jax.random.randint(k5, (E,), 0, NUM_BOND_DIRECTION)
    edge_attr = jnp.stack([bond_type, bond_dir], axis=1).astype(jnp.int32)  # [E,2]
    batch = jnp.array([0, 0, 0, 0, 1, 1, 1, 1], dtype=jnp.int32)

    params = init_params(jax.random.PRNGKey(42), num_layer, emb_dim, num_tasks)

    pooled, node_rep = gnn_graphpred_forward(params, x, edge_index, edge_attr,
                                             batch, G)
    jax.block_until_ready((pooled, node_rep))

    ref_pooled, ref_nodes = reference_forward(params, x, edge_index, edge_attr,
                                              batch, G)
    assert pooled.shape == (G, emb_dim)
    assert node_rep.shape == (N, emb_dim)
    assert bool(jnp.all(jnp.isfinite(pooled))) and bool(jnp.all(jnp.isfinite(node_rep)))
    err = max(float(jnp.max(jnp.abs(pooled - ref_pooled))),
              float(jnp.max(jnp.abs(node_rep - ref_nodes))))
    assert err < 0.1, f"mismatch vs reference: {err}"
    print("KERNEL_OK")
</pallas_src>

<mosaic_0001>
module attributes {stable_mosaic.version = 11 : i64} {
  func.func @fused_gin_kernel(%arg0: i32, %arg1: memref<8x8xbf16, #tpu.memory_space<vmem>>, %arg2: memref<8x128xf32, #tpu.memory_space<vmem>>, %arg3: memref<8x1xf32, #tpu.memory_space<vmem>>, %arg4: memref<8x8xbf16, #tpu.memory_space<vmem>>, %arg5: memref<1x8x128xbf16, #tpu.memory_space<vmem>>, %arg6: memref<1x128x128xbf16, #tpu.memory_space<vmem>>, %arg7: memref<1x1x128xf32, #tpu.memory_space<vmem>>, %arg8: memref<1x128x128xbf16, #tpu.memory_space<vmem>>, %arg9: memref<1x1x128xf32, #tpu.memory_space<vmem>>, %arg10: memref<1x1x128xf32, #tpu.memory_space<vmem>>, %arg11: memref<1x1x128xf32, #tpu.memory_space<vmem>>, %arg12: memref<8x128xf32, #tpu.memory_space<vmem>>, %arg13: memref<8x128xf32, #tpu.memory_space<vmem>>, %arg14: memref<8x128xf32, #tpu.memory_space<vmem>>) attributes {dimension_semantics = [#tpu.dimension_semantics<arbitrary>], iteration_bounds = array<i64: 2>, scalar_prefetch = 0 : i64, scratch_operands = 1 : i64, tpu.core_type = #tpu.core_type<tc>, window_params = [{pipeline_mode = #tpu.pipeline_mode<synchronous>, transform_indices = @transform_0, window_bounds = array<i64: 8, 8>}, {pipeline_mode = #tpu.pipeline_mode<synchronous>, transform_indices = @transform_1, window_bounds = array<i64: 8, 128>}, {pipeline_mode = #tpu.pipeline_mode<synchronous>, transform_indices = @transform_2, window_bounds = array<i64: 8, 1>}, {pipeline_mode = #tpu.pipeline_mode<synchronous>, transform_indices = @transform_3, window_bounds = array<i64: 8, 8>}, {transform_indices = @transform_4, window_bounds = array<i64: 1, 8, 128>}, {transform_indices = @transform_5, window_bounds = array<i64: 1, 128, 128>}, {transform_indices = @transform_6, window_bounds = array<i64: 1, 1, 128>}, {transform_indices = @transform_7, window_bounds = array<i64: 1, 128, 128>}, {transform_indices = @transform_8, window_bounds = array<i64: 1, 1, 128>}, {transform_indices = @transform_9, window_bounds = array<i64: 1, 1, 128>}, {transform_indices = @transform_10, window_bounds = array<i64: 1, 1, 128>}, {pipeline_mode = #tpu.pipeline_mode<synchronous>, transform_indices = @transform_11, window_bounds = array<i64: 8, 128>}, {pipeline_mode = #tpu.pipeline_mode<synchronous>, transform_indices = @transform_12, window_bounds = array<i64: 8, 128>}]} {
    %c0_i32 = arith.constant 0 : i32
    %0 = arith.cmpi eq, %arg0, %c0_i32 : i32
    %1 = arith.extui %0 : i1 to i32
    %c0_i32_0 = arith.constant 0 : i32
    %2 = arith.cmpi ne, %1, %c0_i32_0 : i32
    scf.if %2 {
      %c0_39 = arith.constant 0 : index
      %c0_40 = arith.constant 0 : index
      %66 = vector.load %arg2[%c0_39, %c0_40] : memref<8x128xf32, #tpu.memory_space<vmem>>, vector<8x128xf32>
      %c0_41 = arith.constant 0 : index
      %c0_42 = arith.constant 0 : index
      %67 = vector.load %arg14[%c0_41, %c0_42] : memref<8x128xf32, #tpu.memory_space<vmem>>, vector<8x128xf32>
      tpu.vector_store %arg14[%c0_41, %c0_42], %66 {strides = array<i32>} : memref<8x128xf32, #tpu.memory_space<vmem>>, vector<8x128xf32>,
    } else {
    }
    %c0 = arith.constant 0 : index
    %c0_1 = arith.constant 0 : index
    %3 = vector.load %arg1[%c0, %c0_1] : memref<8x8xbf16, #tpu.memory_space<vmem>>, vector<8x8xbf16>
    %c0_2 = arith.constant 0 : index
    %c0_3 = arith.constant 0 : index
    %4 = vector.load %arg14[%c0_2, %c0_3] : memref<8x128xf32, #tpu.memory_space<vmem>>, vector<8x128xf32>
    %5 = arith.truncf %4 : vector<8x128xf32> to vector<8x128xbf16>
    %cst = arith.constant dense<0.000000e+00> : vector<8x128xf32>
    %6 = tpu.matmul %3, %5, %cst {dimension_numbers = #tpu.dot_dimension_numbers<[1], [0], [0], [1], [0, 0, 1, 1], [], []>} : vector<8x8xbf16>, vector<8x128xbf16>, vector<8x128xf32> -> vector<8x128xf32>
    %c0_4 = arith.constant 0 : index
    %c0_5 = arith.constant 0 : index
    %c0_6 = arith.constant 0 : index
    %7 = vector.load %arg5[%c0_4, %c0_5, %c0_6] : memref<1x8x128xbf16, #tpu.memory_space<vmem>>, vector<1x8x128xbf16>
    %8 = vector.shape_cast %7 : vector<1x8x128xbf16> to vector<8x128xbf16>
    %9 = arith.extf %8 : vector<8x128xbf16> to vector<8x128xf32>
    %10 = arith.addf %6, %9 : vector<8x128xf32>
    %11 = arith.truncf %10 : vector<8x128xf32> to vector<8x128xbf16>
    %c0_7 = arith.constant 0 : index
    %c0_8 = arith.constant 0 : index
    %c0_9 = arith.constant 0 : index
    %12 = vector.load %arg6[%c0_7, %c0_8, %c0_9] : memref<1x128x128xbf16, #tpu.memory_space<vmem>>, vector<1x128x128xbf16>
    %13 = vector.shape_cast %12 : vector<1x128x128xbf16> to vector<128x128xbf16>
    %cst_10 = arith.constant dense<0.000000e+00> : vector<8x128xf32>
    %14 = tpu.matmul %11, %13, %cst_10 {dimension_numbers = #tpu.dot_dimension_numbers<[1], [0], [0], [1], [0, 0, 1, 1], [], []>} : vector<8x128xbf16>, vector<128x128xbf16>, vector<8x128xf32> -> vector<8x128xf32>
    %c0_11 = arith.constant 0 : index
    %c0_12 = arith.constant 0 : index
    %c0_13 = arith.constant 0 : index
    %15 = vector.load %arg7[%c0_11, %c0_12, %c0_13] : memref<1x1x128xf32, #tpu.memory_space<vmem>>, vector<1x1x128xf32>
    %16 = vector.shape_cast %15 : vector<1x1x128xf32> to vector<1x128xf32>
    %17 = vector.broadcast %16 : vector<1x128xf32> to vector<8x128xf32>
    %18 = arith.addf %14, %17 : vector<8x128xf32>
    %cst_14 = arith.constant 0.000000e+00 : f32
    %19 = vector.broadcast %cst_14 : f32 to vector<8x128xf32>
    %20 = arith.maximumf %18, %19 : vector<8x128xf32>
    %21 = arith.truncf %20 : vector<8x128xf32> to vector<8x128xbf16>
    %c0_15 = arith.constant 0 : index
    %c0_16 = arith.constant 0 : index
    %c0_17 = arith.constant 0 : index
    %22 = vector.load %arg8[%c0_15, %c0_16, %c0_17] : memref<1x128x128xbf16, #tpu.memory_space<vmem>>, vector<1x128x128xbf16>
    %23 = vector.shape_cast %22 : vector<1x128x128xbf16> to vector<128x128xbf16>
    %cst_18 = arith.constant dense<0.000000e+00> : vector<8x128xf32>
    %24 = tpu.matmul %21, %23, %cst_18 {dimension_numbers = #tpu.dot_dimension_numbers<[1], [0], [0], [1], [0, 0, 1, 1], [], []>} : vector<8x128xbf16>, vector<128x128xbf16>, vector<8x128xf32> -> vector<8x128xf32>
    %c0_19 = arith.constant 0 : index
    %c0_20 = arith.constant 0 : index
    %c0_21 = arith.constant 0 : index
    %25 = vector.load %arg9[%c0_19, %c0_20, %c0_21] : memref<1x1x128xf32, #tpu.memory_space<vmem>>, vector<1x1x128xf32>
    %26 = vector.shape_cast %25 : vector<1x1x128xf32> to vector<1x128xf32>
    %27 = vector.broadcast %26 : vector<1x128xf32> to vector<8x128xf32>
    %28 = arith.addf %24, %27 : vector<8x128xf32>
    %c0_22 = arith.constant 0 : index
    %c0_23 = arith.constant 0 : index
    %29 = vector.load %arg3[%c0_22, %c0_23] : memref<8x1xf32, #tpu.memory_space<vmem>>, vector<8x1xf32>
    %30 = vector.broadcast %29 : vector<8x1xf32> to vector<8x128xf32>
    %31 = arith.mulf %28, %30 : vector<8x128xf32>
    %cst_24 = arith.constant dense<0.000000e+00> : vector<128xf32>
    %32 = vector.multi_reduction <add>, %31, %cst_24 [0] : vector<8x128xf32> to vector<128xf32>
    %33 = vector.shape_cast %32 : vector<128xf32> to vector<1x128xf32>
    %cst_25 = arith.constant 1.250000e-01 : f32
    %34 = vector.broadcast %cst_25 : f32 to vector<1x128xf32>
    %35 = arith.mulf %33, %34 : vector<1x128xf32>
    %36 = arith.mulf %31, %31 : vector<8x128xf32>
    %cst_26 = arith.constant dense<0.000000e+00> : vector<128xf32>
    %37 = vector.multi_reduction <add>, %36, %cst_26 [0] : vector<8x128xf32> to vector<128xf32>
    %38 = vector.shape_cast %37 : vector<128xf32> to vector<1x128xf32>
    %cst_27 = arith.constant 1.250000e-01 : f32
    %39 = vector.broadcast %cst_27 : f32 to vector<1x128xf32>
    %40 = arith.mulf %38, %39 : vector<1x128xf32>
    %41 = arith.mulf %35, %35 : vector<1x128xf32>
    %42 = arith.subf %40, %41 : vector<1x128xf32>
    %cst_28 = arith.constant 0.000000e+00 : f32
    %43 = vector.broadcast %cst_28 : f32 to vector<1x128xf32>
    %44 = arith.maximumf %42, %43 : vector<1x128xf32>
    %45 = vector.broadcast %35 : vector<1x128xf32> to vector<8x128xf32>
    %46 = arith.subf %28, %45 : vector<8x128xf32>
    %cst_29 = arith.constant 9.99999974E-6 : f32
    %47 = vector.broadcast %cst_29 : f32 to vector<1x128xf32>
    %48 = arith.addf %44, %47 : vector<1x128xf32>
    %49 = math.rsqrt %48 : vector<1x128xf32>
    %50 = vector.broadcast %49 : vector<1x128xf32> to vector<8x128xf32>
    %51 = arith.mulf %46, %50 : vector<8x128xf32>
    %c0_30 = arith.constant 0 : index
    %c0_31 = arith.constant 0 : index
    %c0_32 = arith.constant 0 : index
    %52 = vector.load %arg10[%c0_30, %c0_31, %c0_32] : memref<1x1x128xf32, #tpu.memory_space<vmem>>, vector<1x1x128xf32>
    %53 = vector.shape_cast %52 : vector<1x1x128xf32> to vector<1x128xf32>
    %54 = vector.broadcast %53 : vector<1x128xf32> to vector<8x128xf32>
    %55 = arith.mulf %51, %54 : vector<8x128xf32>
    %c0_33 = arith.constant 0 : index
    %c0_34 = arith.constant 0 : index
    %c0_35 = arith.constant 0 : index
    %56 = vector.load %arg11[%c0_33, %c0_34, %c0_35] : memref<1x1x128xf32, #tpu.memory_space<vmem>>, vector<1x1x128xf32>
    %57 = vector.shape_cast %56 : vector<1x1x128xf32> to vector<1x128xf32>
    %58 = vector.broadcast %57 : vector<1x128xf32> to vector<8x128xf32>
    %59 = arith.addf %55, %58 : vector<8x128xf32>
    %c1_i32 = arith.constant 1 : i32
    %60 = arith.cmpi ne, %arg0, %c1_i32 : i32
    %61 = arith.extui %60 : i1 to i32
    %c0_i32_36 = arith.constant 0 : i32
    %62 = arith.cmpi ne, %61, %c0_i32_36 : i32
    scf.if %62 {
      %cst_39 = arith.constant 0.000000e+00 : f32
      %66 = vector.broadcast %cst_39 : f32 to vector<8x128xf32>
      %67 = arith.maximumf %59, %66 : vector<8x128xf32>
      %c0_40 = arith.constant 0 : index
      %c0_41 = arith.constant 0 : index
      %68 = vector.load %arg14[%c0_40, %c0_41] : memref<8x128xf32, #tpu.memory_space<vmem>>, vector<8x128xf32>
      tpu.vector_store %arg14[%c0_40, %c0_41], %67 {strides = array<i32>} : memref<8x128xf32, #tpu.memory_space<vmem>>, vector<8x128xf32>,
    } else {
    }
    %c1_i32_37 = arith.constant 1 : i32
    %63 = arith.cmpi eq, %arg0, %c1_i32_37 : i32
    %64 = arith.extui %63 : i1 to i32
    %c0_i32_38 = arith.constant 0 : i32
    %65 = arith.cmpi ne, %64, %c0_i32_38 : i32
    scf.if %65 {
      %c0_39 = arith.constant 0 : index
      %c0_40 = arith.constant 0 : index
      %66 = vector.load %arg12[%c0_39, %c0_40] : memref<8x128xf32, #tpu.memory_space<vmem>>, vector<8x128xf32>
      tpu.vector_store %arg12[%c0_39, %c0_40], %59 {strides = array<i32>} : memref<8x128xf32, #tpu.memory_space<vmem>>, vector<8x128xf32>,
      %c0_41 = arith.constant 0 : index
      %c0_42 = arith.constant 0 : index
      %67 = vector.load %arg4[%c0_41, %c0_42] : memref<8x8xbf16, #tpu.memory_space<vmem>>, vector<8x8xbf16>
      %68 = arith.truncf %59 : vector<8x128xf32> to vector<8x128xbf16>
      %cst_43 = arith.constant dense<0.000000e+00> : vector<8x128xf32>
      %69 = tpu.matmul %67, %68, %cst_43 {dimension_numbers = #tpu.dot_dimension_numbers<[1], [0], [0], [1], [0, 0, 1, 1], [], []>} : vector<8x8xbf16>, vector<8x128xbf16>, vector<8x128xf32> -> vector<8x128xf32>
      %c0_44 = arith.constant 0 : index
      %c0_45 = arith.constant 0 : index
      %70 = vector.load %arg13[%c0_44, %c0_45] : memref<8x128xf32, #tpu.memory_space<vmem>>, vector<8x128xf32>
      tpu.vector_store %arg13[%c0_44, %c0_45], %69 {strides = array<i32>} : memref<8x128xf32, #tpu.memory_space<vmem>>, vector<8x128xf32>,
    } else {
    }
    return
  }
  func.func @transform_0(%arg0: i32) -> (i32, i32) {
    %c0_i32 = arith.constant 0 : i32
    %c0_i32_0 = arith.constant 0 : i32
    %c0_i32_1 = arith.constant 0 : i32
    return %c0_i32, %c0_i32_0 : i32, i32
  }
  func.func @transform_1(%arg0: i32) -> (i32, i32) {
    %c0_i32 = arith.constant 0 : i32
    %c0_i32_0 = arith.constant 0 : i32
    %c0_i32_1 = arith.constant 0 : i32
    return %c0_i32, %c0_i32_0 : i32, i32
  }
  func.func @transform_2(%arg0: i32) -> (i32, i32) {
    %c0_i32 = arith.constant 0 : i32
    %c0_i32_0 = arith.constant 0 : i32
    %c0_i32_1 = arith.constant 0 : i32
    return %c0_i32, %c0_i32_0 : i32, i32
  }
  func.func @transform_3(%arg0: i32) -> (i32, i32) {
    %c0_i32 = arith.constant 0 : i32
    %c0_i32_0 = arith.constant 0 : i32
    %c0_i32_1 = arith.constant 0 : i32
    return %c0_i32, %c0_i32_0 : i32, i32
  }
  func.func @transform_4(%arg0: i32) -> (i32, i32, i32) {
    %c0_i32 = arith.constant 0 : i32
    %c0_i32_0 = arith.constant 0 : i32
    %c0_i32_1 = arith.constant 0 : i32
    return %arg0, %c0_i32, %c0_i32_0 : i32, i32, i32
  }
  func.func @transform_5(%arg0: i32) -> (i32, i32, i32) {
    %c0_i32 = arith.constant 0 : i32
    %c0_i32_0 = arith.constant 0 : i32
    %c0_i32_1 = arith.constant 0 : i32
    return %arg0, %c0_i32, %c0_i32_0 : i32, i32, i32
  }
  func.func @transform_6(%arg0: i32) -> (i32, i32, i32) {
    %c0_i32 = arith.constant 0 : i32
    %c0_i32_0 = arith.constant 0 : i32
    %c0_i32_1 = arith.constant 0 : i32
    return %arg0, %c0_i32, %c0_i32_0 : i32, i32, i32
  }
  func.func @transform_7(%arg0: i32) -> (i32, i32, i32) {
    %c0_i32 = arith.constant 0 : i32
    %c0_i32_0 = arith.constant 0 : i32
    %c0_i32_1 = arith.constant 0 : i32
    return %arg0, %c0_i32, %c0_i32_0 : i32, i32, i32
  }
  func.func @transform_8(%arg0: i32) -> (i32, i32, i32) {
    %c0_i32 = arith.constant 0 : i32
    %c0_i32_0 = arith.constant 0 : i32
    %c0_i32_1 = arith.constant 0 : i32
    return %arg0, %c0_i32, %c0_i32_0 : i32, i32, i32
  }
  func.func @transform_9(%arg0: i32) -> (i32, i32, i32) {
    %c0_i32 = arith.constant 0 : i32
    %c0_i32_0 = arith.constant 0 : i32
    %c0_i32_1 = arith.constant 0 : i32
    return %arg0, %c0_i32, %c0_i32_0 : i32, i32, i32
  }
  func.func @transform_10(%arg0: i32) -> (i32, i32, i32) {
    %c0_i32 = arith.constant 0 : i32
    %c0_i32_0 = arith.constant 0 : i32
    %c0_i32_1 = arith.constant 0 : i32
    return %arg0, %c0_i32, %c0_i32_0 : i32, i32, i32
  }
  func.func @transform_11(%arg0: i32) -> (i32, i32) {
    %c0_i32 = arith.constant 0 : i32
    %c0_i32_0 = arith.constant 0 : i32
    %c0_i32_1 = arith.constant 0 : i32
    return %c0_i32, %c0_i32_0 : i32, i32
  }
  func.func @transform_12(%arg0: i32) -> (i32, i32) {
    %c0_i32 = arith.constant 0 : i32
    %c0_i32_0 = arith.constant 0 : i32
    %c0_i32_1 = arith.constant 0 : i32
    return %c0_i32, %c0_i32_0 : i32, i32
  }
}

</mosaic_0001>

<llo_original>
// kernel: tpu_custom_call.1
$region0: #{tpu_custom_call.1}
  #allocation0 [shape = 'u32[]', space=smem, size = 0x4, offset = 0x4, fixed_abs, tag = 'smem constant byte address 0x4 - core index']
  #allocation1 [shape = 'u32[144,128]{1,0:T(1,128)}', space=vmem, size = 0x12000, scoped, tag = 'internal scratch']
  #allocation2 [shape = 'f32[8,128]{1,0:T(8,128)}', space=vmem, size = 0x1000, scoped, tag = 'scratch operand']
  %s0 = inlined_call_operand.hbm [shape: bf16[8,8], index: 0, kind: input, shape index: {}]
  %s1 = inlined_call_operand.vmem [shape: f32[8,128], index: 1, kind: input, shape index: {}]
  %s2 = inlined_call_operand.vmem [shape: f32[8,1], index: 2, kind: input, shape index: {}]
  %s3 = inlined_call_operand.hbm [shape: bf16[8,8], index: 3, kind: input, shape index: {}]
  %s4 = inlined_call_operand.vmem [shape: bf16[2,8,128], index: 4, kind: input, shape index: {}]
  %s5 = inlined_call_operand.hbm [shape: bf16[2,128,128], index: 5, kind: input, shape index: {}]
  %s6 = inlined_call_operand.vmem [shape: f32[2,1,128], index: 6, kind: input, shape index: {}]
  %s7 = inlined_call_operand.hbm [shape: bf16[2,128,128], index: 7, kind: input, shape index: {}]
  %s8 = inlined_call_operand.vmem [shape: f32[2,1,128], index: 8, kind: input, shape index: {}]
  %s9 = inlined_call_operand.vmem [shape: f32[2,1,128], index: 9, kind: input, shape index: {}]
  %s10 = inlined_call_operand.vmem [shape: f32[2,1,128], index: 10, kind: input, shape index: {}]
  %s11 = inlined_call_operand.hbm [shape: f32[8,128], index: 11, kind: output, shape index: {0}]
  %s12 = inlined_call_operand.hbm [shape: f32[8,128], index: 12, kind: output, shape index: {1}]
  %13 = xla_tuple %s11, %s12
  %s14 = sld [smem:[#allocation0]]
  $region113: #{tpu_custom_call.1} parent=0
    _
  %s16 = ssub.s32 1, %s14
  %s17 = scalar_select 0, %s16, %s14
  $region1: #{tpu_custom_call.1} parent=0
    #allocation3 [shape = 'u8[2048]{0}', space=vmem, size = 0x800, scoped, tag = 'input window, operand 0, single buffered']
    #allocation4 [shape = 's32[2]{0}', space=sflag, size = 0x8, scoped, tag = 'scoped memory for tpu_custom_call.1']
    #allocation5 [shape = 's32[2]{0}', space=sflag, size = 0x8, scoped, tag = 'scoped memory for tpu_custom_call.1']
    #allocation6 [shape = 'u8[2048]{0}', space=vmem, size = 0x800, scoped, tag = 'input window, operand 3, single buffered']
    #allocation7 [shape = 's32[1]{0}', space=sflag, size = 0x4, scoped, tag = 'scoped memory for tpu_custom_call.1']
    #allocation8 [shape = 'u8[65536]{0}', space=vmem, size = 0x10000, scoped, tag = 'input window, operand 5']
    #allocation9 [shape = 'u8[65536]{0}', space=vmem, size = 0x10000, scoped, tag = 'input window, operand 7']
    #allocation10 [shape = 'u8[4096]{0}', space=vmem, size = 0x1000, scoped, tag = 'output window, operand 0, single buffered']
    #allocation11 [shape = 'u8[4096]{0}', space=vmem, size = 0x1000, scoped, tag = 'output window, operand 1, single buffered']
    #allocation12 [shape = 's32[1]{0}', space=sflag, size = 0x4, scoped, tag = 'scoped memory for tpu_custom_call.1']
    %18 = vsyncpa [#allocation4], 0
    %19 = vsyncpa [#allocation7], 0
    %20 = vsyncpa [#allocation5], 0
    %21 = vsyncpa [#allocation12], 0
    loop: start=0, step=1, limit=4
    $region2: #{tpu_custom_call.1} parent=1 // loop_pre_header
      _
    $region3: #{tpu_custom_call.1} parent=1 // loop_header
      %s23 = sphi 0, %s27
      %p24 = scmp.ge.s32.totalorder %s23, 4
      %s31 = sphi 0, %s31
      %s33 = sphi 0, %s31
      %s34 = sphi 0, %s33
      %s48 = sphi 0, %s34
      %s52 = sphi 0, %s52
      %s54 = sphi 0, %s52
      %s55 = sphi 0, %s54
      %s69 = sphi 0, %s55
      %s73 = sphi 0, %s73
      %s75 = sphi 0, %s73
      %s76 = sphi 0, %s75
      %s90 = sphi 0, %s76
      %s94 = sphi 0, %s94
      %s96 = sphi 0, %s94
      %s97 = sphi 0, %s96
      %s111 = sphi 0, %s97
      %s117 = sphi 0, %s119
      %s120 = sphi 0, %s117
      %s121 = sphi 0, %s120
      %s137 = sphi 0, %s121
      %s143 = sphi 0, %s145
      %s146 = sphi 0, %s143
      %s147 = sphi 0, %s146
      %s163 = sphi 0, %s147
      %s169 = sphi 0, %s171
      %s172 = sphi 0, %s169
      %s173 = sphi 0, %s172
      %s189 = sphi 0, %s173
      %s195 = sphi 0, %s197
      %s198 = sphi 0, %s195
      %s199 = sphi 0, %s198
      %s215 = sphi 0, %s199
      %s221 = sphi 0, %s223
      %s224 = sphi 0, %s221
      %s225 = sphi 0, %s224
      %s241 = sphi 0, %s225
      %s247 = sphi 0, %s249
      %s250 = sphi 0, %s247
      %s251 = sphi 0, %s250
      %s267 = sphi 0, %s251
      %s273 = sphi 0, %s275
      %s276 = sphi 0, %s273
      %s277 = sphi 0, %s276
      %s293 = sphi 0, %s277
      %s297 = sphi 0, %s297
      %s299 = sphi 0, %s297
      %s300 = sphi 0, %s299
      %s314 = sphi 0, %s300
      %s318 = sphi 0, %s318
      %s320 = sphi 0, %s318
      %s321 = sphi 0, %s320
      %s335 = sphi 0, %s321
    $region4: #{tpu_custom_call.1} parent=1 // loop_header_branch
      %26 = sbr.rel (%p24) target = $region8
    $region5: #{tpu_custom_call.1} parent=1 // loop_body
      %s28 = ssub.s32 %s23, 1
      %s29 = ssub.s32 %s23, 2
      %s30 = sadd.s32 %s23, 1
      %s32 = sadd.s32 %s31, 1
      %p35 = scmp.eq.s32.totalorder %s23, 1
      %p36 = scmp.ne.s32.totalorder %s31, %s33
      %p37 = scmp.eq.s32.totalorder %s23, 0
      %p38 = por %p36, %p37
      %p39 = scmp.ne.s32.totalorder %s31, %s33
      %p40 = scmp.eq.s32.totalorder %s28, 1
      %p41 = por %p39, %p40
      %p42 = scmp.ne.s32.totalorder %s33, %s34
      %p43 = scmp.eq.s32.totalorder %s28, 0
      %p44 = por %p42, %p43
      %p45 = scmp.ne.s32.totalorder %s33, %s34
      %p46 = scmp.eq.s32.totalorder %s29, 1
      %p47 = por %p45, %p46
      %p49 = scmp.ne.s32.totalorder %s34, %s48
      %p50 = scmp.eq.s32.totalorder %s29, 0
      %p51 = por %p49, %p50
      %s53 = sadd.s32 %s52, 1
      %p56 = scmp.eq.s32.totalorder %s23, 1
      %p57 = scmp.ne.s32.totalorder %s52, %s54
      %p58 = scmp.eq.s32.totalorder %s23, 0
      %p59 = por %p57, %p58
      %p60 = scmp.ne.s32.totalorder %s52, %s54
      %p61 = scmp.eq.s32.totalorder %s28, 1
      %p62 = por %p60, %p61
      %p63 = scmp.ne.s32.totalorder %s54, %s55
      %p64 = scmp.eq.s32.totalorder %s28, 0
      %p65 = por %p63, %p64
      %p66 = scmp.ne.s32.totalorder %s54, %s55
      %p67 = scmp.eq.s32.totalorder %s29, 1
      %p68 = por %p66, %p67
      %p70 = scmp.ne.s32.totalorder %s55, %s69
      %p71 = scmp.eq.s32.totalorder %s29, 0
      %p72 = por %p70, %p71
      %s74 = sadd.s32 %s73, 1
      %p77 = scmp.eq.s32.totalorder %s23, 1
      %p78 = scmp.ne.s32.totalorder %s73, %s75
      %p79 = scmp.eq.s32.totalorder %s23, 0
      %p80 = por %p78, %p79
      %p81 = scmp.ne.s32.totalorder %s73, %s75
      %p82 = scmp.eq.s32.totalorder %s28, 1
      %p83 = por %p81, %p82
      %p84 = scmp.ne.s32.totalorder %s75, %s76
      %p85 = scmp.eq.s32.totalorder %s28, 0
      %p86 = por %p84, %p85
      %p87 = scmp.ne.s32.totalorder %s75, %s76
      %p88 = scmp.eq.s32.totalorder %s29, 1
      %p89 = por %p87, %p88
      %p91 = scmp.ne.s32.totalorder %s76, %s90
      %p92 = scmp.eq.s32.totalorder %s29, 0
      %p93 = por %p91, %p92
      %s95 = sadd.s32 %s94, 1
      %p98 = scmp.eq.s32.totalorder %s23, 1
      %p99 = scmp.ne.s32.totalorder %s94, %s96
      %p100 = scmp.eq.s32.totalorder %s23, 0
      %p101 = por %p99, %p100
      %p102 = scmp.ne.s32.totalorder %s94, %s96
      %p103 = scmp.eq.s32.totalorder %s28, 1
      %p104 = por %p102, %p103
      %p105 = scmp.ne.s32.totalorder %s96, %s97
      %p106 = scmp.eq.s32.totalorder %s28, 0
      %p107 = por %p105, %p106
      %p108 = scmp.ne.s32.totalorder %s96, %s97
      %p109 = scmp.eq.s32.totalorder %s29, 1
      %p110 = por %p108, %p109
      %p112 = scmp.ne.s32.totalorder %s97, %s111
      %p113 = scmp.eq.s32.totalorder %s29, 0
      %p114 = por %p112, %p113
      %s115 = ssub.s32 %s23, %s30
      %p116 = scmp.eq.s32.totalorder %s115, 0
      %s118 = sadd.s32 %s117, 1
      %s119 = scalar_select %p116, %s117, %s118
      %p122 = pneg %p116
      %p123 = scmp.eq.s32.totalorder %s23, 1
      %p124 = por %p122, %p123
      %p125 = scmp.ne.s32.totalorder %s117, %s120
      %p126 = scmp.eq.s32.totalorder %s23, 0
      %p127 = por %p125, %p126
      %p128 = scmp.ne.s32.totalorder %s117, %s120
      %p129 = scmp.eq.s32.totalorder %s28, 1
      %p130 = por %p128, %p129
      %p131 = scmp.ne.s32.totalorder %s120, %s121
      %p132 = scmp.eq.s32.totalorder %s28, 0
      %p133 = por %p131, %p132
      %p134 = scmp.ne.s32.totalorder %s120, %s121
      %p135 = scmp.eq.s32.totalorder %s29, 1
      %p136 = por %p134, %p135
      %p138 = scmp.ne.s32.totalorder %s121, %s137
      %p139 = scmp.eq.s32.totalorder %s29, 0
      %p140 = por %p138, %p139
      %s141 = ssub.s32 %s23, %s30
      %p142 = scmp.eq.s32.totalorder %s141, 0
      %s144 = sadd.s32 %s143, 1
      %s145 = scalar_select %p142, %s143, %s144
      %p148 = pneg %p142
      %p149 = scmp.eq.s32.totalorder %s23, 1
      %p150 = por %p148, %p149
      %p151 = scmp.ne.s32.totalorder %s143, %s146
      %p152 = scmp.eq.s32.totalorder %s23, 0
      %p153 = por %p151, %p152
      %p154 = scmp.ne.s32.totalorder %s143, %s146
      %p155 = scmp.eq.s32.totalorder %s28, 1
      %p156 = por %p154, %p155
      %p157 = scmp.ne.s32.totalorder %s146, %s147
      %p158 = scmp.eq.s32.totalorder %s28, 0
      %p159 = por %p157, %p158
      %p160 = scmp.ne.s32.totalorder %s146, %s147
      %p161 = scmp.eq.s32.totalorder %s29, 1
      %p162 = por %p160, %p161
      %p164 = scmp.ne.s32.totalorder %s147, %s163
      %p165 = scmp.eq.s32.totalorder %s29, 0
      %p166 = por %p164, %p165
      %s167 = ssub.s32 %s23, %s30
      %p168 = scmp.eq.s32.totalorder %s167, 0
      %s170 = sadd.s32 %s169, 1
      %s171 = scalar_select %p168, %s169, %s170
      %p174 = pneg %p168
      %p175 = scmp.eq.s32.totalorder %s23, 1
      %p176 = por %p174, %p175
      %p177 = scmp.ne.s32.totalorder %s169, %s172
      %p178 = scmp.eq.s32.totalorder %s23, 0
      %p179 = por %p177, %p178
      %p180 = scmp.ne.s32.totalorder %s169, %s172
      %p181 = scmp.eq.s32.totalorder %s28, 1
      %p182 = por %p180, %p181
      %p183 = scmp.ne.s32.totalorder %s172, %s173
      %p184 = scmp.eq.s32.totalorder %s28, 0
      %p185 = por %p183, %p184
      %p186 = scmp.ne.s32.totalorder %s172, %s173
      %p187 = scmp.eq.s32.totalorder %s29, 1
      %p188 = por %p186, %p187
      %p190 = scmp.ne.s32.totalorder %s173, %s189
      %p191 = scmp.eq.s32.totalorder %s29, 0
      %p192 = por %p190, %p191
      %s193 = ssub.s32 %s23, %s30
      %p194 = scmp.eq.s32.totalorder %s193, 0
      %s196 = sadd.s32 %s195, 1
      %s197 = scalar_select %p194, %s195, %s196
      %p200 = pneg %p194
      %p201 = scmp.eq.s32.totalorder %s23, 1
      %p202 = por %p200, %p201
      %p203 = scmp.ne.s32.totalorder %s195, %s198
      %p204 = scmp.eq.s32.totalorder %s23, 0
      %p205 = por %p203, %p204
      %p206 = scmp.ne.s32.totalorder %s195, %s198
      %p207 = scmp.eq.s32.totalorder %s28, 1
      %p208 = por %p206, %p207
      %p209 = scmp.ne.s32.totalorder %s198, %s199
      %p210 = scmp.eq.s32.totalorder %s28, 0
      %p211 = por %p209, %p210
      %p212 = scmp.ne.s32.totalorder %s198, %s199
      %p213 = scmp.eq.s32.totalorder %s29, 1
      %p214 = por %p212, %p213
      %p216 = scmp.ne.s32.totalorder %s199, %s215
      %p217 = scmp.eq.s32.totalorder %s29, 0
      %p218 = por %p216, %p217
      %s219 = ssub.s32 %s23, %s30
      %p220 = scmp.eq.s32.totalorder %s219, 0
      %s222 = sadd.s32 %s221, 1
      %s223 = scalar_select %p220, %s221, %s222
      %p226 = pneg %p220
      %p227 = scmp.eq.s32.totalorder %s23, 1
      %p228 = por %p226, %p227
      %p229 = scmp.ne.s32.totalorder %s221, %s224
      %p230 = scmp.eq.s32.totalorder %s23, 0
      %p231 = por %p229, %p230
      %p232 = scmp.ne.s32.totalorder %s221, %s224
      %p233 = scmp.eq.s32.totalorder %s28, 1
      %p234 = por %p232, %p233
      %p235 = scmp.ne.s32.totalorder %s224, %s225
      %p236 = scmp.eq.s32.totalorder %s28, 0
      %p237 = por %p235, %p236
      %p238 = scmp.ne.s32.totalorder %s224, %s225
      %p239 = scmp.eq.s32.totalorder %s29, 1
      %p240 = por %p238, %p239
      %p242 = scmp.ne.s32.totalorder %s225, %s241
      %p243 = scmp.eq.s32.totalorder %s29, 0
      %p244 = por %p242, %p243
      %s245 = ssub.s32 %s23, %s30
      %p246 = scmp.eq.s32.totalorder %s245, 0
      %s248 = sadd.s32 %s247, 1
      %s249 = scalar_select %p246, %s247, %s248
      %p252 = pneg %p246
      %p253 = scmp.eq.s32.totalorder %s23, 1
      %p254 = por %p252, %p253
      %p255 = scmp.ne.s32.totalorder %s247, %s250
      %p256 = scmp.eq.s32.totalorder %s23, 0
      %p257 = por %p255, %p256
      %p258 = scmp.ne.s32.totalorder %s247, %s250
      %p259 = scmp.eq.s32.totalorder %s28, 1
      %p260 = por %p258, %p259
      %p261 = scmp.ne.s32.totalorder %s250, %s251
      %p262 = scmp.eq.s32.totalorder %s28, 0
      %p263 = por %p261, %p262
      %p264 = scmp.ne.s32.totalorder %s250, %s251
      %p265 = scmp.eq.s32.totalorder %s29, 1
      %p266 = por %p264, %p265
      %p268 = scmp.ne.s32.totalorder %s251, %s267
      %p269 = scmp.eq.s32.totalorder %s29, 0
      %p270 = por %p268, %p269
      %s271 = ssub.s32 %s23, %s30
      %p272 = scmp.eq.s32.totalorder %s271, 0
      %s274 = sadd.s32 %s273, 1
      %s275 = scalar_select %p272, %s273, %s274
      %p278 = pneg %p272
      %p279 = scmp.eq.s32.totalorder %s23, 1
      %p280 = por %p278, %p279
      %p281 = scmp.ne.s32.totalorder %s273, %s276
      %p282 = scmp.eq.s32.totalorder %s23, 0
      %p283 = por %p281, %p282
      %p284 = scmp.ne.s32.totalorder %s273, %s276
      %p285 = scmp.eq.s32.totalorder %s28, 1
      %p286 = por %p284, %p285
      %p287 = scmp.ne.s32.totalorder %s276, %s277
      %p288 = scmp.eq.s32.totalorder %s28, 0
      %p289 = por %p287, %p288
      %p290 = scmp.ne.s32.totalorder %s276, %s277
      %p291 = scmp.eq.s32.totalorder %s29, 1
      %p292 = por %p290, %p291
      %p294 = scmp.ne.s32.totalorder %s277, %s293
      %p295 = scmp.eq.s32.totalorder %s29, 0
      %p296 = por %p294, %p295
      %s298 = sadd.s32 %s297, 1
      %p301 = scmp.eq.s32.totalorder %s23, 1
      %p302 = scmp.ne.s32.totalorder %s297, %s299
      %p303 = scmp.eq.s32.totalorder %s23, 0
      %p304 = por %p302, %p303
      %p305 = scmp.ne.s32.totalorder %s297, %s299
      %p306 = scmp.eq.s32.totalorder %s28, 1
      %p307 = por %p305, %p306
      %p308 = scmp.ne.s32.totalorder %s299, %s300
      %p309 = scmp.eq.s32.totalorder %s28, 0
      %p310 = por %p308, %p309
      %p311 = scmp.ne.s32.totalorder %s299, %s300
      %p312 = scmp.eq.s32.totalorder %s29, 1
      %p313 = por %p311, %p312
      %p315 = scmp.ne.s32.totalorder %s300, %s314
      %p316 = scmp.eq.s32.totalorder %s29, 0
      %p317 = por %p315, %p316
      %s319 = sadd.s32 %s318, 1
      %p322 = scmp.eq.s32.totalorder %s23, 1
      %p323 = scmp.ne.s32.totalorder %s318, %s320
      %p324 = scmp.eq.s32.totalorder %s23, 0
      %p325 = por %p323, %p324
      %p326 = scmp.ne.s32.totalorder %s318, %s320
      %p327 = scmp.eq.s32.totalorder %s28, 1
      %p328 = por %p326, %p327
      %p329 = scmp.ne.s32.totalorder %s320, %s321
      %p330 = scmp.eq.s32.totalorder %s28, 0
      %p331 = por %p329, %p330
      %p332 = scmp.ne.s32.totalorder %s320, %s321
      %p333 = scmp.eq.s32.totalorder %s29, 1
      %p334 = por %p332, %p333
      %p336 = scmp.ne.s32.totalorder %s321, %s335
      %p337 = scmp.eq.s32.totalorder %s29, 0
      %p338 = por %p336, %p337
      %p339 = scmp.le.s32.totalorder 1, %s23
      %p340 = scmp.lt.s32.totalorder %s23, 3
      %p341 = pnand %p339, %p340
      %p342 = pneg %p341
      // Predicated region
      $region9: #{tpu_custom_call.1} parent=5 // pred_check
        _
      $region10: #{tpu_custom_call.1} parent=5 // pred_check_branch
        %344 = sbr.rel (%p341) target = $region12
      $region11: #{tpu_custom_call.1} parent=5 // pred_region
        %s345 = ssub.s32 %s23, 1
        // Predicated region
        $region13: #{tpu_custom_call.1} parent=11 // pred_check
          %p346 = pneg %p44
        $region14: #{tpu_custom_call.1} parent=11 // pred_check_branch
          %348 = sbr.rel (%p346) target = $region16
        $region15: #{tpu_custom_call.1} parent=11 // pred_region
          %s350 = ssub.s32 64, 64
          %351 = vsyncadd [#allocation4], %s350
          %s353 = sshll.u32 [#allocation3], 4
          %s354 = int_to_ptr.vmem [resolvable:$true] %s353
          %356 = dma.hbm_to_vmem [thread:$0]  %s0, 64, %s354, [#allocation4]
        $region16: #{tpu_custom_call.1} parent=11 // pred_fallthru
          _
        // Predicated region
        $region17: #{tpu_custom_call.1} parent=11 // pred_check
          %p357 = pneg %p65
        $region18: #{tpu_custom_call.1} parent=11 // pred_check_branch
          %359 = sbr.rel (%p357) target = $region20
        $region19: #{tpu_custom_call.1} parent=11 // pred_region
          _
        $region20: #{tpu_custom_call.1} parent=11 // pred_fallthru
          _
        // Predicated region
        $region21: #{tpu_custom_call.1} parent=11 // pred_check
          %p360 = pneg %p86
        $region22: #{tpu_custom_call.1} parent=11 // pred_check_branch
          %362 = sbr.rel (%p360) target = $region24
        $region23: #{tpu_custom_call.1} parent=11 // pred_region
          _
        $region24: #{tpu_custom_call.1} parent=11 // pred_fallthru
          _
        // Predicated region
        $region25: #{tpu_custom_call.1} parent=11 // pred_check
          %p363 = pneg %p107
        $region26: #{tpu_custom_call.1} parent=11 // pred_check_branch
          %365 = sbr.rel (%p363) target = $region28
        $region27: #{tpu_custom_call.1} parent=11 // pred_region
          %s367 = ssub.s32 64, 64
          %368 = vsyncadd [#allocation7], %s367
          %s370 = sshll.u32 [#allocation6], 4
          %s371 = int_to_ptr.vmem [resolvable:$true] %s370
          %373 = dma.hbm_to_vmem [thread:$0]  %s3, 64, %s371, [#allocation7]
        $region28: #{tpu_custom_call.1} parent=11 // pred_fallthru
          _
      $region12: #{tpu_custom_call.1} parent=5 // pred_fallthru
        _
      %p374 = scmp.lt.s32.totalorder %s23, 2
      // Predicated region
      $region29: #{tpu_custom_call.1} parent=5 // pred_check
        %p375 = pneg %p374
      $region30: #{tpu_custom_call.1} parent=5 // pred_check_branch
        %377 = sbr.rel (%p375) target = $region32
      $region31: #{tpu_custom_call.1} parent=5 // pred_region
        // Predicated region
        $region33: #{tpu_custom_call.1} parent=31 // pred_check
          %p378 = pneg %p127
        $region34: #{tpu_custom_call.1} parent=31 // pred_check_branch
          %380 = sbr.rel (%p378) target = $region36
        $region35: #{tpu_custom_call.1} parent=31 // pred_region
          %p381 = scmp.lt.s32.totalorder %s23, 1
          %s382 = scalar_select %p381, %s23, 1
          %s383 = smul.addr %s382, 4
          %s384 = scalar_lea.vmem %s4, %s383
        $region36: #{tpu_custom_call.1} parent=31 // pred_fallthru
          _
        // Predicated region
        $region37: #{tpu_custom_call.1} parent=31 // pred_check
          %p385 = pneg %p153
        $region38: #{tpu_custom_call.1} parent=31 // pred_check_branch
          %387 = sbr.rel (%p385) target = $region40
        $region39: #{tpu_custom_call.1} parent=31 // pred_region
          %s388 = sand.u32 %s23, 1
          %s389 = scalar_lea.sflag [#allocation4], %s388
          %s390 = sand.u32 %s143, 1
          %s391 = smul.addr %s390, 64
          %s392 = scalar_lea.vmem [#allocation8], %s391
          %s394 = ssub.s32 1024, 1024
          %395 = vsyncadd %s389, %s394
          %s396 = smul.addr %s23, 16
          %s397 = smul.addr %s396, 64
          %s398 = scalar_lea.hbm %s5, %s397
          %s399 = sshll.u32 %s392, 4
          %s400 = int_to_ptr.vmem [resolvable:$true] %s399
          %405 = dma.hbm_to_vmem [thread:$0]  %s398, 1024, %s400, %s389, 64, 64, 4
        $region40: #{tpu_custom_call.1} parent=31 // pred_fallthru
          _
        // Predicated region
        $region41: #{tpu_custom_call.1} parent=31 // pred_check
          %p406 = pneg %p179
        $region42: #{tpu_custom_call.1} parent=31 // pred_check_branch
          %408 = sbr.rel (%p406) target = $region44
        $region43: #{tpu_custom_call.1} parent=31 // pred_region
          %p409 = scmp.lt.s32.totalorder %s23, 1
          %s410 = scalar_select %p409, %s23, 1
          %s411 = scalar_lea.vmem %s6, %s410
        $region44: #{tpu_custom_call.1} parent=31 // pred_fallthru
          _
        // Predicated region
        $region45: #{tpu_custom_call.1} parent=31 // pred_check
          %p412 = pneg %p205
        $region46: #{tpu_custom_call.1} parent=31 // pred_check_branch
          %414 = sbr.rel (%p412) target = $region48
        $region47: #{tpu_custom_call.1} parent=31 // pred_region
          %s415 = sand.u32 %s23, 1
          %s416 = scalar_lea.sflag [#allocation4], %s415
          %s417 = sand.u32 %s195, 1
          %s418 = smul.addr %s417, 64
          %s419 = scalar_lea.vmem [#allocation9], %s418
          %s421 = ssub.s32 1024, 1024
          %422 = vsyncadd %s416, %s421
          %s423 = smul.addr %s23, 16
          %s424 = smul.addr %s423, 64
          %s425 = scalar_lea.hbm %s7, %s424
          %s426 = sshll.u32 %s419, 4
          %s427 = int_to_ptr.vmem [resolvable:$true] %s426
          %432 = dma.hbm_to_vmem [thread:$0]  %s425, 1024, %s427, %s416, 64, 64, 4
        $region48: #{tpu_custom_call.1} parent=31 // pred_fallthru
          _
        // Predicated region
        $region49: #{tpu_custom_call.1} parent=31 // pred_check
          %p433 = pneg %p231
        $region50: #{tpu_custom_call.1} parent=31 // pred_check_branch
          %435 = sbr.rel (%p433) target = $region52
        $region51: #{tpu_custom_call.1} parent=31 // pred_region
          %p436 = scmp.lt.s32.totalorder %s23, 1
          %s437 = scalar_select %p436, %s23, 1
          %s438 = scalar_lea.vmem %s8, %s437
        $region52: #{tpu_custom_call.1} parent=31 // pred_fallthru
          _
        // Predicated region
        $region53: #{tpu_custom_call.1} parent=31 // pred_check
          %p439 = pneg %p257
        $region54: #{tpu_custom_call.1} parent=31 // pred_check_branch
          %441 = sbr.rel (%p439) target = $region56
        $region55: #{tpu_custom_call.1} parent=31 // pred_region
          %p442 = scmp.lt.s32.totalorder %s23, 1
          %s443 = scalar_select %p442, %s23, 1
          %s444 = scalar_lea.vmem %s9, %s443
        $region56: #{tpu_custom_call.1} parent=31 // pred_fallthru
          _
        // Predicated region
        $region57: #{tpu_custom_call.1} parent=31 // pred_check
          %p445 = pneg %p283
        $region58: #{tpu_custom_call.1} parent=31 // pred_check_branch
          %447 = sbr.rel (%p445) target = $region60
        $region59: #{tpu_custom_call.1} parent=31 // pred_region
          %p448 = scmp.lt.s32.totalorder %s23, 1
          %s449 = scalar_select %p448, %s23, 1
          %s450 = scalar_lea.vmem %s10, %s449
        $region60: #{tpu_custom_call.1} parent=31 // pred_fallthru
          _
      $region32: #{tpu_custom_call.1} parent=5 // pred_fallthru
        _
      %p451 = scmp.le.s32.totalorder 1, %s23
      %p452 = scmp.lt.s32.totalorder %s23, 3
      %p453 = pnand %p451, %p452
      %p454 = pneg %p453
      // Predicated region
      $region61: #{tpu_custom_call.1} parent=5 // pred_check
        _
      $region62: #{tpu_custom_call.1} parent=5 // pred_check_branch
        %456 = sbr.rel (%p453) target = $region64
      $region63: #{tpu_custom_call.1} parent=5 // pred_region
        %s457 = ssub.s32 %s23, 1
        // Predicated region
        $region65: #{tpu_custom_call.1} parent=63 // pred_check
          %p458 = pneg %p44
        $region66: #{tpu_custom_call.1} parent=63 // pred_check_branch
          %460 = sbr.rel (%p458) target = $region68
        $region67: #{tpu_custom_call.1} parent=63 // pred_region
          %461 = dma.done [#allocation4], 64
        $region68: #{tpu_custom_call.1} parent=63 // pred_fallthru
          _
        // Predicated region
        $region69: #{tpu_custom_call.1} parent=63 // pred_check
          %p462 = pneg %p107
        $region70: #{tpu_custom_call.1} parent=63 // pred_check_branch
          %464 = sbr.rel (%p462) target = $region72
        $region71: #{tpu_custom_call.1} parent=63 // pred_region
          %465 = dma.done [#allocation7], 64
        $region72: #{tpu_custom_call.1} parent=63 // pred_fallthru
          _
        %s466 = sand.u32 %s28, 1
        %s467 = scalar_lea.sflag [#allocation4], %s466
        %s468 = sand.u32 %s146, 1
        %s469 = smul.addr %s468, 64
        %s470 = scalar_lea.vmem [#allocation8], %s469
        // Predicated region
        $region73: #{tpu_custom_call.1} parent=63 // pred_check
          %p471 = pneg %p159
        $region74: #{tpu_custom_call.1} parent=63 // pred_check_branch
          %473 = sbr.rel (%p471) target = $region76
        $region75: #{tpu_custom_call.1} parent=63 // pred_region
          %474 = dma.done %s467, 1024
        $region76: #{tpu_custom_call.1} parent=63 // pred_fallthru
          _
        %s475 = sand.u32 %s28, 1
        %s476 = scalar_lea.sflag [#allocation4], %s475
        %s477 = sand.u32 %s198, 1
        %s478 = smul.addr %s477, 64
        %s479 = scalar_lea.vmem [#allocation9], %s478
        // Predicated region
        $region77: #{tpu_custom_call.1} parent=63 // pred_check
          %p480 = pneg %p211
        $region78: #{tpu_custom_call.1} parent=63 // pred_check_branch
          %482 = sbr.rel (%p480) target = $region80
        $region79: #{tpu_custom_call.1} parent=63 // pred_region
          %483 = dma.done %s476, 1024
        $region80: #{tpu_custom_call.1} parent=63 // pred_fallthru
          _
        %p484 = pneg %p44
        %p485 = pneg %p41
        %p486 = pneg %p65
        %p487 = pneg %p62
        %p488 = pneg %p86
        %p489 = pneg %p83
        %p490 = pneg %p107
        %p491 = pneg %p104
        %p492 = scmp.lt.s32.totalorder %s28, 1
        %s493 = scalar_select %p492, %s28, 1
        %s494 = smul.addr %s493, 4
        %s495 = scalar_lea.vmem %s4, %s494
        %p496 = pneg %p133
        %p497 = pneg %p130
        %s498 = sand.u32 %s28, 1
        %s499 = scalar_lea.sflag [#allocation4], %s498
        %s500 = sand.u32 %s146, 1
        %s501 = smul.addr %s500, 64
        %s502 = scalar_lea.vmem [#allocation8], %s501
        %p503 = pneg %p159
        %p504 = pneg %p156
        %p505 = scmp.lt.s32.totalorder %s28, 1
        %s506 = scalar_select %p505, %s28, 1
        %s507 = scalar_lea.vmem %s6, %s506
        %p508 = pneg %p185
        %p509 = pneg %p182
        %s510 = sand.u32 %s28, 1
        %s511 = scalar_lea.sflag [#allocation4], %s510
        %s512 = sand.u32 %s198, 1
        %s513 = smul.addr %s512, 64
        %s514 = scalar_lea.vmem [#allocation9], %s513
        %p515 = pneg %p211
        %p516 = pneg %p208
        %p517 = scmp.lt.s32.totalorder %s28, 1
        %s518 = scalar_select %p517, %s28, 1
        %s519 = scalar_lea.vmem %s8, %s518
        %p520 = pneg %p237
        %p521 = pneg %p234
        %p522 = scmp.lt.s32.totalorder %s28, 1
        %s523 = scalar_select %p522, %s28, 1
        %s524 = scalar_lea.vmem %s9, %s523
        %p525 = pneg %p263
        %p526 = pneg %p260
        %p527 = scmp.lt.s32.totalorder %s28, 1
        %s528 = scalar_select %p527, %s28, 1
        %s529 = scalar_lea.vmem %s10, %s528
        %p530 = pneg %p289
        %p531 = pneg %p286
        %p532 = pneg %p310
        %p533 = pneg %p307
        %p534 = pneg %p331
        %p535 = pneg %p328
        %p536 = scmp.lt.s32.totalorder %s28, 1
        %s537 = scalar_select %p536, %s28, 1
        %s538 = smul.addr %s537, 4
        %s539 = scalar_lea.vmem %s4, %s538
        %p540 = scmp.lt.s32.totalorder %s28, 1
        %s541 = scalar_select %p540, %s28, 1
        %s542 = scalar_lea.vmem %s6, %s541
        %p543 = scmp.lt.s32.totalorder %s28, 1
        %s544 = scalar_select %p543, %s28, 1
        %s545 = scalar_lea.vmem %s8, %s544
        %p546 = scmp.lt.s32.totalorder %s28, 1
        %s547 = scalar_select %p546, %s28, 1
        %s548 = scalar_lea.vmem %s9, %s547
        %p549 = scmp.lt.s32.totalorder %s28, 1
        %s550 = scalar_select %p549, %s28, 1
        %s551 = scalar_lea.vmem %s10, %s550
        %p553 = scmp.eq.s32.totalorder %s28, 0
        // Predicated region
        $region81: #{tpu_custom_call.1} parent=63 // pred_check
          %p554 = pneg %p553
        $region82: #{tpu_custom_call.1} parent=63 // pred_check_branch
          %556 = sbr.rel (%p554) target = $region84
        $region83: #{tpu_custom_call.1} parent=63 // pred_region
          %v557 = vld [vmem:[%s1] sm:$0xff]
          %558 = vst [vmem:[#allocation2] sm:$0xff] %v557
        $region84: #{tpu_custom_call.1} parent=63 // pred_fallthru
          _
        %v559 = vld [vmem:[#allocation3] sm:$0xf]
        %v560 = vld [vmem:[#allocation2] sm:$0xff]
        %v561 = vpack.c.bf16 %v560, %v560
        %v562 = vld [vmem:[%s539] sm:$0xf]
        %v563 = vunpack.c.l.bf16 %v562
        %vm564 = vcmask 64512
        %v566 = vsel %vm564, %v559, 0
        %vm568 = vcmask 1043456
        %v570 = vsel %vm568, %v561, 0
        %572 = vmatprep.subr.bf16.mxu0 0
        %573 = vmatpush1.bf16.msra.mxu0 0
        %574 = vmatprep.subr.bf16.mxu0 0
        %575 = vmatpush1.bf16.msra.mxu0 0
        %576 = vmatprep.subr.bf16.mxu0 0
        %577 = vmatpush1.bf16.msra.mxu0 0
        %578 = vmatprep.subr.bf16.mxu0 0
        %579 = vmatpush1.bf16.msra.mxu0 0
        %580 = vmatprep.subr.bf16.mxu0 0
        %581 = vmatpush1.bf16.msra.mxu0 0
        %582 = vmatprep.subr.bf16.mxu0 0
        %583 = vmatpush1.bf16.msra.mxu0 0
        %584 = vmatprep.subr.bf16.mxu0 0
        %585 = vmatpush1.bf16.msra.mxu0 0
        %586 = vmatprep.subr.bf16.mxu0 0
        %587 = vmatpush1.bf16.msra.mxu0 %v570
        %588 = vmatprep.subr.bf16.mxu0 0
        %589 = vmatpush2.bf16.msra.mxu0 0
        %590 = vmatprep.subr.bf16.mxu0 0
        %591 = vmatpush2.bf16.msra.mxu0 0
        %592 = vmatprep.subr.bf16.mxu0 0
        %593 = vmatpush2.bf16.msra.mxu0 0
        %594 = vmatprep.subr.bf16.mxu0 0
        %595 = vmatpush2.bf16.msra.mxu0 0
        %596 = vmatprep.subr.bf16.mxu0 0
        %597 = vmatpush2.bf16.msra.mxu0 0
        %598 = vmatprep.subr.bf16.mxu0 0
        %599 = vmatpush2.bf16.msra.mxu0 0
        %600 = vmatprep.subr.bf16.mxu0 0
        %601 = vmatpush2.bf16.msra.mxu0 0
        %602 = vmatprep.subr.bf16.mxu0 0
        %603 = vmatpush2.bf16.msra.mxu0 0
        %604 = vmatprep.mubr.bf16.mxu0 0
        %605 = vmatmul.mubr.bf16.gmra.mxu0 %v566
        %v606 = vpop.f32.mrf.mxu0
        %v607 = vadd.f32 %v563, %v606
        %v608 = vpop.f32.mrf.mxu0
        %v609 = vpop.f32.mrf.mxu0
        %v610 = vpop.f32.mrf.mxu0
        %611 = vdwg.mxu0
        %v612 = vpack.c.bf16 %v607, %v607
        %v613 = vld [vmem:[%s470] sm:$0xf]
        %v614 = vld [vmem:[%s470 + $0x4] sm:$0xf]
        %v615 = vld [vmem:[%s470 + $0x8] sm:$0xf]
        %v616 = vld [vmem:[%s470 + $0xc] sm:$0xf]
        %v617 = vld [vmem:[%s470 + $0x10] sm:$0xf]
        %v618 = vld [vmem:[%s470 + $0x14] sm:$0xf]
        %v619 = vld [vmem:[%s470 + $0x18] sm:$0xf]
        %v620 = vld [vmem:[%s470 + $0x1c] sm:$0xf]
        %v621 = vld [vmem:[%s470 + $0x20] sm:$0xf]
        %v622 = vld [vmem:[%s470 + $0x24] sm:$0xf]
        %v623 = vld [vmem:[%s470 + $0x28] sm:$0xf]
        %v624 = vld [vmem:[%s470 + $0x2c] sm:$0xf]
        %v625 = vld [vmem:[%s470 + $0x30] sm:$0xf]
        %v626 = vld [vmem:[%s470 + $0x34] sm:$0xf]
        %v627 = vld [vmem:[%s470 + $0x38] sm:$0xf]
        %v628 = vld [vmem:[%s470 + $0x3c] sm:$0xf]
        %v629 = vld [vmem:[%s542] sm:$0x1]
        %v631 = vlaneseq
        %v632 = vshrl.u32 %v631, 7
        %v633 = vsub.s32 0, %v632
        %v634 = vrot.slane %v629, %v633
        %v652 = vunpack.c.l.b16 %v613
        %v653 = vunpack.c.l.b16 %v614
        %v654 = vunpack.c.l.b16 %v615
        %v655 = vunpack.c.l.b16 %v616
        %v656 = vunpack.c.l.b16 %v617
        %v657 = vunpack.c.l.b16 %v618
        %v658 = vunpack.c.l.b16 %v619
        %v659 = vunpack.c.l.b16 %v620
        %v660 = vunpack.c.l.b16 %v621
        %v661 = vunpack.c.l.b16 %v622
        %v662 = vunpack.c.l.b16 %v623
        %v663 = vunpack.c.l.b16 %v624
        %v664 = vunpack.c.l.b16 %v625
        %v665 = vunpack.c.l.b16 %v626
        %v666 = vunpack.c.l.b16 %v627
        %v667 = vunpack.c.l.b16 %v628
        %v668 = vpack.c.b16 %v653, %v652
        %v669 = vpack.c.b16 %v655, %v654
        %v670 = vpack.c.b16 %v657, %v656
        %v671 = vpack.c.b16 %v659, %v658
        %v672 = vpack.c.b16 %v661, %v660
        %v673 = vpack.c.b16 %v663, %v662
        %v674 = vpack.c.b16 %v665, %v664
        %v675 = vpack.c.b16 %v667, %v666
        %684 = vmatprep.subr.bf16.mxu0 0
        %685 = vmatpush1.bf16.msra.mxu0 %v675
        %686 = vmatprep.subr.bf16.mxu0 0
        %687 = vmatpush1.bf16.msra.mxu0 %v674
        %688 = vmatprep.subr.bf16.mxu0 0
        %689 = vmatpush1.bf16.msra.mxu0 %v673
        %690 = vmatprep.subr.bf16.mxu0 0
        %691 = vmatpush1.bf16.msra.mxu0 %v672
        %692 = vmatprep.subr.bf16.mxu0 0
        %693 = vmatpush1.bf16.msra.mxu0 %v671
        %694 = vmatprep.subr.bf16.mxu0 0
        %695 = vmatpush1.bf16.msra.mxu0 %v670
        %696 = vmatprep.subr.bf16.mxu0 0
        %697 = vmatpush1.bf16.msra.mxu0 %v669
        %698 = vmatprep.subr.bf16.mxu0 0
        %699 = vmatpush1.bf16.msra.mxu0 %v668
        %700 = vmatprep.subr.bf16.mxu0 0
        %701 = vmatpush2.bf16.msra.mxu0 0
        %702 = vmatprep.subr.bf16.mxu0 0
        %703 = vmatpush2.bf16.msra.mxu0 0
        %704 = vmatprep.subr.bf16.mxu0 0
        %705 = vmatpush2.bf16.msra.mxu0 0
        %706 = vmatprep.subr.bf16.mxu0 0
        %707 = vmatpush2.bf16.msra.mxu0 0
        %708 = vmatprep.subr.bf16.mxu0 0
        %709 = vmatpush2.bf16.msra.mxu0 0
        %710 = vmatprep.subr.bf16.mxu0 0
        %711 = vmatpush2.bf16.msra.mxu0 0
        %712 = vmatprep.subr.bf16.mxu0 0
        %713 = vmatpush2.bf16.msra.mxu0 0
        %714 = vmatprep.subr.bf16.mxu0 0
        %715 = vmatpush2.bf16.msra.mxu0 0
        %716 = vmatprep.mubr.bf16.mxu0 0
        %717 = vmatmul.mubr.bf16.gmra.mxu0 %v612
        %v718 = vpop.f32.mrf.mxu0
        %v719 = vadd.f32 %v634, %v718
        %v720 = vpop.f32.mrf.mxu0
        %v721 = vpop.f32.mrf.mxu0
        %v722 = vpop.f32.mrf.mxu0
        %723 = vdwg.mxu0
        %v724 = vmax.f32 %v719, 0.0
        %v725 = vpack.c.bf16 %v724, %v724
        %v726 = vld [vmem:[%s479] sm:$0xf]
        %v727 = vld [vmem:[%s479 + $0x4] sm:$0xf]
        %v728 = vld [vmem:[%s479 + $0x8] sm:$0xf]
        %v729 = vld [vmem:[%s479 + $0xc] sm:$0xf]
        %v730 = vld [vmem:[%s479 + $0x10] sm:$0xf]
        %v731 = vld [vmem:[%s479 + $0x14] sm:$0xf]
        %v732 = vld [vmem:[%s479 + $0x18] sm:$0xf]
        %v733 = vld [vmem:[%s479 + $0x1c] sm:$0xf]
        %v734 = vld [vmem:[%s479 + $0x20] sm:$0xf]
        %v735 = vld [vmem:[%s479 + $0x24] sm:$0xf]
        %v736 = vld [vmem:[%s479 + $0x28] sm:$0xf]
        %v737 = vld [vmem:[%s479 + $0x2c] sm:$0xf]
        %v738 = vld [vmem:[%s479 + $0x30] sm:$0xf]
        %v739 = vld [vmem:[%s479 + $0x34] sm:$0xf]
        %v740 = vld [vmem:[%s479 + $0x38] sm:$0xf]
        %v741 = vld [vmem:[%s479 + $0x3c] sm:$0xf]
        %v742 = vld [vmem:[%s545] sm:$0x1]
        %v744 = vlaneseq
        %v745 = vshrl.u32 %v744, 7
        %v746 = vsub.s32 0, %v745
        %v747 = vrot.slane %v742, %v746
        %v765 = vunpack.c.l.b16 %v726
        %v766 = vunpack.c.l.b16 %v727
        %v767 = vunpack.c.l.b16 %v728
        %v768 = vunpack.c.l.b16 %v729
        %v769 = vunpack.c.l.b16 %v730
        %v770 = vunpack.c.l.b16 %v731
        %v771 = vunpack.c.l.b16 %v732
        %v772 = vunpack.c.l.b16 %v733
        %v773 = vunpack.c.l.b16 %v734
        %v774 = vunpack.c.l.b16 %v735
        %v775 = vunpack.c.l.b16 %v736
        %v776 = vunpack.c.l.b16 %v737
        %v777 = vunpack.c.l.b16 %v738
        %v778 = vunpack.c.l.b16 %v739
        %v779 = vunpack.c.l.b16 %v740
        %v780 = vunpack.c.l.b16 %v741
        %v781 = vpack.c.b16 %v766, %v765
        %v782 = vpack.c.b16 %v768, %v767
        %v783 = vpack.c.b16 %v770, %v769
        %v784 = vpack.c.b16 %v772, %v771
        %v785 = vpack.c.b16 %v774, %v773
        %v786 = vpack.c.b16 %v776, %v775
        %v787 = vpack.c.b16 %v778, %v777
        %v788 = vpack.c.b16 %v780, %v779
        %797 = vmatprep.subr.bf16.mxu0 0
        %798 = vmatpush1.bf16.msra.mxu0 %v788
        %799 = vmatprep.subr.bf16.mxu0 0
        %800 = vmatpush1.bf16.msra.mxu0 %v787
        %801 = vmatprep.subr.bf16.mxu0 0
        %802 = vmatpush1.bf16.msra.mxu0 %v786
        %803 = vmatprep.subr.bf16.mxu0 0
        %804 = vmatpush1.bf16.msra.mxu0 %v785
        %805 = vmatprep.subr.bf16.mxu0 0
        %806 = vmatpush1.bf16.msra.mxu0 %v784
        %807 = vmatprep.subr.bf16.mxu0 0
        %808 = vmatpush1.bf16.msra.mxu0 %v783
        %809 = vmatprep.subr.bf16.mxu0 0
        %810 = vmatpush1.bf16.msra.mxu0 %v782
        %811 = vmatprep.subr.bf16.mxu0 0
        %812 = vmatpush1.bf16.msra.mxu0 %v781
        %813 = vmatprep.subr.bf16.mxu0 0
        %814 = vmatpush2.bf16.msra.mxu0 0
        %815 = vmatprep.subr.bf16.mxu0 0
        %816 = vmatpush2.bf16.msra.mxu0 0
        %817 = vmatprep.subr.bf16.mxu0 0
        %818 = vmatpush2.bf16.msra.mxu0 0
        %819 = vmatprep.subr.bf16.mxu0 0
        %820 = vmatpush2.bf16.msra.mxu0 0
        %821 = vmatprep.subr.bf16.mxu0 0
        %822 = vmatpush2.bf16.msra.mxu0 0
        %823 = vmatprep.subr.bf16.mxu0 0
        %824 = vmatpush2.bf16.msra.mxu0 0
        %825 = vmatprep.subr.bf16.mxu0 0
        %826 = vmatpush2.bf16.msra.mxu0 0
        %827 = vmatprep.subr.bf16.mxu0 0
        %828 = vmatpush2.bf16.msra.mxu0 0
        %829 = vmatprep.mubr.bf16.mxu0 0
        %830 = vmatmul.mubr.bf16.gmra.mxu0 %v725
        %v831 = vpop.f32.mrf.mxu0
        %v832 = vadd.f32 %v747, %v831
        %v833 = vpop.f32.mrf.mxu0
        %v834 = vpop.f32.mrf.mxu0
        %v835 = vpop.f32.mrf.mxu0
        %836 = vdwg.mxu0
        %v837 = vld [vmem:[%s2] sm:$0xff]
        %839 = vset.pattern.permute.xlu0 0
        %840 = vperm.xlu0 %839, %v837
        %v841 = vpop.permute.xlu0 %840
        %v843 = vmul.f32 %v832, %v841
        %v844 = vrot.slane %v843, 4
        %v845 = vadd.f32 %v843, %v844
        %v846 = vrot.slane %v845, 2
        %v847 = vadd.f32 %v845, %v846
        %v848 = vrot.slane %v847, 1
        %v849 = vadd.f32 %v847, %v848
        %v850 = vmul.f32 %v849, 0.125
        %v851 = vmul.f32 %v843, %v843
        %v852 = vrot.slane %v851, 4
        %v853 = vadd.f32 %v851, %v852
        %v854 = vrot.slane %v853, 2
        %v855 = vadd.f32 %v853, %v854
        %v856 = vrot.slane %v855, 1
        %v857 = vadd.f32 %v855, %v856
        %v858 = vmul.f32 %v857, 0.125
        %v859 = vmul.f32 %v850, %v850
        %v860 = vsub.f32 %v858, %v859
        %v861 = vmax.f32 %v860, 0.0
        %v862 = vsub.f32 %v832, %v850
        %v863 = vadd.f32 %v861, 1e-05
        %v864 = vrsqrt.pop %v863
        %v865 = vmul.f32 %v862, %v864
        %v866 = vld [vmem:[%s548] sm:$0x1]
        %v868 = vlaneseq
        %v869 = vshrl.u32 %v868, 7
        %v870 = vsub.s32 0, %v869
        %v871 = vrot.slane %v866, %v870
        %v873 = vmul.f32 %v865, %v871
        %v874 = vld [vmem:[%s551] sm:$0x1]
        %v876 = vlaneseq
        %v877 = vshrl.u32 %v876, 7
        %v878 = vsub.s32 0, %v877
        %v879 = vrot.slane %v874, %v878
        %v881 = vadd.f32 %v873, %v879
        %p882 = scmp.ne.s32.totalorder %s28, 1
        // Predicated region
        $region85: #{tpu_custom_call.1} parent=63 // pred_check
          %p883 = pneg %p882
        $region86: #{tpu_custom_call.1} parent=63 // pred_check_branch
          %885 = sbr.rel (%p883) target = $region88
        $region87: #{tpu_custom_call.1} parent=63 // pred_region
          %v886 = vmax.f32 %v881, 0.0
          %887 = vst [vmem:[#allocation2] sm:$0xff] %v886
        $region88: #{tpu_custom_call.1} parent=63 // pred_fallthru
          _
        %p888 = scmp.eq.s32.totalorder %s28, 1
        // Predicated region
        $region89: #{tpu_custom_call.1} parent=63 // pred_check
          %p889 = pneg %p888
        $region90: #{tpu_custom_call.1} parent=63 // pred_check_branch
          %891 = sbr.rel (%p889) target = $region92
        $region91: #{tpu_custom_call.1} parent=63 // pred_region
          %892 = vst [vmem:[#allocation10] sm:$0xff] %v881
          %v893 = vld [vmem:[#allocation6] sm:$0xf]
          %v894 = vpack.c.bf16 %v881, %v881
          %v896 = vsel %vm564, %v893, 0
          %v899 = vsel %vm568, %v894, 0
          %901 = vmatprep.subr.bf16.mxu0 0
          %902 = vmatpush1.bf16.msra.mxu0 0
          %903 = vmatprep.subr.bf16.mxu0 0
          %904 = vmatpush1.bf16.msra.mxu0 0
          %905 = vmatprep.subr.bf16.mxu0 0
          %906 = vmatpush1.bf16.msra.mxu0 0
          %907 = vmatprep.subr.bf16.mxu0 0
          %908 = vmatpush1.bf16.msra.mxu0 0
          %909 = vmatprep.subr.bf16.mxu0 0
          %910 = vmatpush1.bf16.msra.mxu0 0
          %911 = vmatprep.subr.bf16.mxu0 0
          %912 = vmatpush1.bf16.msra.mxu0 0
          %913 = vmatprep.subr.bf16.mxu0 0
          %914 = vmatpush1.bf16.msra.mxu0 0
          %915 = vmatprep.subr.bf16.mxu0 0
          %916 = vmatpush1.bf16.msra.mxu0 %v899
          %917 = vmatprep.subr.bf16.mxu0 0
          %918 = vmatpush2.bf16.msra.mxu0 0
          %919 = vmatprep.subr.bf16.mxu0 0
          %920 = vmatpush2.bf16.msra.mxu0 0
          %921 = vmatprep.subr.bf16.mxu0 0
          %922 = vmatpush2.bf16.msra.mxu0 0
          %923 = vmatprep.subr.bf16.mxu0 0
          %924 = vmatpush2.bf16.msra.mxu0 0
          %925 = vmatprep.subr.bf16.mxu0 0
          %926 = vmatpush2.bf16.msra.mxu0 0
          %927 = vmatprep.subr.bf16.mxu0 0
          %928 = vmatpush2.bf16.msra.mxu0 0
          %929 = vmatprep.subr.bf16.mxu0 0
          %930 = vmatpush2.bf16.msra.mxu0 0
          %931 = vmatprep.subr.bf16.mxu0 0
          %932 = vmatpush2.bf16.msra.mxu0 0
          %933 = vmatprep.mubr.bf16.mxu0 0
          %934 = vmatmul.mubr.bf16.gmra.mxu0 %v896
          %v935 = vpop.f32.mrf.mxu0
          %v936 = vadd.f32 0.0, %v935
          %v937 = vpop.f32.mrf.mxu0
          %v938 = vpop.f32.mrf.mxu0
          %v939 = vpop.f32.mrf.mxu0
          %940 = vdwg.mxu0
          %941 = vst [vmem:[#allocation11] sm:$0xff] %v936
        $region92: #{tpu_custom_call.1} parent=63 // pred_fallthru
          _
        // Predicated region
        $region93: #{tpu_custom_call.1} parent=63 // pred_check
          %p942 = pneg %p307
        $region94: #{tpu_custom_call.1} parent=63 // pred_check_branch
          %944 = sbr.rel (%p942) target = $region96
        $region95: #{tpu_custom_call.1} parent=63 // pred_region
          %s946 = ssub.s32 128, 128
          %947 = vsyncadd [#allocation5], %s946
          %s949 = sshll.u32 [#allocation10], 4
          %s950 = int_to_ptr.vmem [resolvable:$true] %s949
          %952 = dma.vmem_to_hbm [thread:$0]  %s950, 128, %s11, [#allocation5]
        $region96: #{tpu_custom_call.1} parent=63 // pred_fallthru
          _
        // Predicated region
        $region97: #{tpu_custom_call.1} parent=63 // pred_check
          %p953 = pneg %p328
        $region98: #{tpu_custom_call.1} parent=63 // pred_check_branch
          %955 = sbr.rel (%p953) target = $region100
        $region99: #{tpu_custom_call.1} parent=63 // pred_region
          %s957 = ssub.s32 128, 128
          %958 = vsyncadd [#allocation12], %s957
          %s960 = sshll.u32 [#allocation11], 4
          %s961 = int_to_ptr.vmem [resolvable:$true] %s960
          %963 = dma.vmem_to_hbm [thread:$0]  %s961, 128, %s12, [#allocation12]
        $region100: #{tpu_custom_call.1} parent=63 // pred_fallthru
          _
        // Predicated region
        $region101: #{tpu_custom_call.1} parent=63 // pred_check
          %p964 = pneg %p307
        $region102: #{tpu_custom_call.1} parent=63 // pred_check_branch
          %966 = sbr.rel (%p964) target = $region104
        $region103: #{tpu_custom_call.1} parent=63 // pred_region
          %967 = dma.done [#allocation5], 128
        $region104: #{tpu_custom_call.1} parent=63 // pred_fallthru
          _
        // Predicated region
        $region105: #{tpu_custom_call.1} parent=63 // pred_check
          %p968 = pneg %p328
        $region106: #{tpu_custom_call.1} parent=63 // pred_check_branch
          %970 = sbr.rel (%p968) target = $region108
        $region107: #{tpu_custom_call.1} parent=63 // pred_region
          %971 = dma.done [#allocation12], 128
        $region108: #{tpu_custom_call.1} parent=63 // pred_fallthru
          _
      $region64: #{tpu_custom_call.1} parent=5 // pred_fallthru
        _
      %p972 = scmp.le.s32.totalorder 2, %s23
      // Predicated region
      $region109: #{tpu_custom_call.1} parent=5 // pred_check
        %p973 = pneg %p972
      $region110: #{tpu_custom_call.1} parent=5 // pred_check_branch
        %975 = sbr.rel (%p973) target = $region112
      $region111: #{tpu_custom_call.1} parent=5 // pred_region
        %s976 = ssub.s32 %s23, 2
      $region112: #{tpu_custom_call.1} parent=5 // pred_fallthru
        _
    $region6: #{tpu_custom_call.1} parent=1 // loop_footer
      %s27 = sadd.s32 1, %s23
    $region7: #{tpu_custom_call.1} parent=1 // loop_footer_branch
      %22 = sbr.rel target = $region3
    $region8: #{tpu_custom_call.1} parent=1 // loop_exit
      _
    %977 = vsyncpa [#allocation4], 1
    %s978 = scalar_lea.sflag [#allocation4], 1
    %979 = vsyncpa %s978, 1
    %980 = vsyncpa [#allocation7], 1
    %981 = vsyncpa [#allocation5], 1
    %s982 = scalar_lea.sflag [#allocation5], 1
    %983 = vsyncpa %s982, 1
    %984 = vsyncpa [#allocation12], 1

</llo_original>
